<compile_context>
chip_gen: v7x
topology: tpu7x:2x2x1
jax: 0.10.0
libtpu: 0.0.40
codegen_flags: <defaults>
</compile_context>

<pallas_src>
import jax
import jax.numpy as jnp
from jax.experimental import pallas as pl
from jax.experimental.pallas import tpu as pltpu


def _leaky_relu(x, neg_slope=0.01):
    # matches torch.nn.functional.leaky_relu default negative_slope=0.01
    return jnp.where(x > 0, x, neg_slope * x)


def _round_up(n, m):
    return ((n + m - 1) // m) * m


def slope_dir_kernel(xT_ref,
                     w1_ref, b1_ref,
                     w2_ref, b2_ref,
                     w3_ref, b3_ref,
                     w4_ref, b4_ref,
                     out_ref):
    cdt = w1_ref.dtype                      # MXU input dtype (f32 or bf16)

    # Activations carried as (features, TILE_B): batch on the lane axis.
    h = xT_ref[...]                         # (d_in, TILE_B)

    h = jnp.dot(w1_ref[...], h, preferred_element_type=jnp.float32) + b1_ref[...]
    h = _leaky_relu(h).astype(cdt)          # (d_in,  TILE_B)

    h = jnp.dot(w2_ref[...], h, preferred_element_type=jnp.float32) + b2_ref[...]
    h = _leaky_relu(h).astype(cdt)          # (d_mid, TILE_B)

    h = jnp.dot(w3_ref[...], h, preferred_element_type=jnp.float32) + b3_ref[...]
    h = _leaky_relu(h).astype(cdt)          # (d_mid, TILE_B)

    z = jnp.dot(w4_ref[...], h, preferred_element_type=jnp.float32) + b4_ref[...]
    out_ref[...] = jax.nn.sigmoid(z)        # (1, TILE_B) lane-dense store


def slope_dir_net(x, params, *, tile_b=16384, compute_dtype=jnp.float32):
    """Forward pass of SlopeDirNet.

    x:      (B, 2 + 2*t_len) float32
    params: [(w1,b1), (w2,b2), (w3,b3), (w4,b4)] with w_i in PyTorch
            (out_features, in_features) layout and b_i of shape (out_features,).
    Returns (B, 1) float32.
    """
    (w1, b1), (w2, b2), (w3, b3), (w4, b4) = params
    B, d_in = x.shape
    d_mid = w2.shape[0]
    assert w1.shape == (d_in, d_in) and w2.shape == (d_mid, d_in)
    assert w3.shape == (d_mid, d_mid) and w4.shape == (1, d_mid)

    # --- batch tile: large & lane-aligned (multiple of 128) -----------------
    tile_b = max(128, _round_up(int(tile_b), 128))
    tb = min(tile_b, _round_up(B, 128))
    # Force >= 2 grid steps for moderate/large B so the "parallel" batch axis
    # can shard across both v7x TensorCores (negligible cost on v5e/v6e).
    if B > 256 and _round_up(B, tb) // tb < 2:
        tb = _round_up((B + 1) // 2, 128)
    b_pad = _round_up(B, tb)
    nb = b_pad // tb

    # --- layout plumbing (outside the kernel, cheap vs. the B*d_in read) ----
    # x laid out as (d_in, B_pad): first layer's RHS is natively (K, N) with
    # batch on the lane axis; zero-padded batch columns are sliced off below.
    xT = jnp.transpose(x)
    if b_pad != B:
        xT = jnp.pad(xT, ((0, 0), (0, b_pad - B)))
    xT = xT.astype(compute_dtype)

    ws = [w.astype(compute_dtype) for w in (w1, w2, w3, w4)]
    bs = [b.reshape(-1, 1).astype(jnp.float32) for b in (b1, b2, b3, b4)]

    x_spec = pl.BlockSpec((d_in, tb), lambda i: (0, i))
    out_spec = pl.BlockSpec((1, tb), lambda i: (0, i))

    def const_spec(a):   # fetched once, VMEM-resident across all grid steps
        return pl.BlockSpec(a.shape, lambda i: (0, 0))

    operands = [xT,
                ws[0], bs[0], ws[1], bs[1], ws[2], bs[2], ws[3], bs[3]]
    in_specs = [x_spec] + [const_spec(a) for a in operands[1:]]

    flops = 2 * b_pad * (d_in * d_in + d_in * d_mid + d_mid * d_mid + d_mid)
    param_bytes = sum(int(a.size) * a.dtype.itemsize for a in operands[1:])
    cost = pl.CostEstimate(
        flops=flops,
        transcendentals=2 * b_pad,          # sigmoid = exp + reciprocal
        bytes_accessed=int(xT.size) * xT.dtype.itemsize + b_pad * 4 + param_bytes,
    )

    out_row = pl.pallas_call(
        slope_dir_kernel,
        out_shape=jax.ShapeDtypeStruct((1, b_pad), jnp.float32),
        grid=(nb,),
        in_specs=in_specs,
        out_specs=out_spec,
        compiler_params=pltpu.CompilerParams(
            dimension_semantics=("parallel",)),
        cost_estimate=cost,
    )(*operands)

    # Strip batch padding and restore the (B, 1) layout.
    return out_row[0, :B].reshape(B, 1)


def init_params(key, t_len):
    """Deterministic init matching nn.Linear shapes: W (out, in), b (out,)."""
    d_in = 2 + 2 * t_len
    d_mid = 1 + t_len
    dims = [(d_in, d_in), (d_mid, d_in), (d_mid, d_mid), (1, d_mid)]  # (out, in)
    params = []
    for (fan_out, fan_in) in dims:
        key, kw, kb = jax.random.split(key, 3)
        bound = 1.0 / jnp.sqrt(fan_in)
        w = jax.random.uniform(kw, (fan_out, fan_in), jnp.float32, -bound, bound)
        b = jax.random.uniform(kb, (fan_out,), jnp.float32, -bound, bound)
        params.append((w, b))
    return params


def ref_forward(x, params):
    (w1, b1), (w2, b2), (w3, b3), (w4, b4) = params
    h = _leaky_relu(x @ w1.T + b1)
    h = _leaky_relu(h @ w2.T + b2)
    h = _leaky_relu(h @ w3.T + b3)
    return jax.nn.sigmoid(h @ w4.T + b4)


if __name__ == "__main__":
    # Small, 8-aligned demo shapes: d_in = 2 + 2*t_len = 16, hidden = 1 + t_len = 8
    t_len = 7
    batch = 32

    key = jax.random.PRNGKey(0)
    key, kx = jax.random.split(key)
    x = jax.random.normal(kx, (batch, 2 + 2 * t_len), jnp.float32)
    params = init_params(key, t_len)

    out = slope_dir_net(x, params)
    jax.block_until_ready(out)

    expected = ref_forward(x, params)
    assert out.shape == (batch, 1)
    assert jnp.allclose(out, expected, atol=1e-5, rtol=1e-5)

    # Also exercise a multi-step grid (>= 2 batch tiles -> dual-TC path on v7x).
    key, kx2 = jax.random.split(key)
    x2 = jax.random.normal(kx2, (1000, 2 + 2 * t_len), jnp.float32)
    out2 = slope_dir_net(x2, params)
    jax.block_until_ready(out2)
    assert jnp.allclose(out2, ref_forward(x2, params), atol=1e-5, rtol=1e-5)

    print("KERNEL_OK")
</pallas_src>

<mosaic_0001>
module attributes {stable_mosaic.version = 11 : i64} {
  func.func @slope_dir_kernel(%arg0: i32, %arg1: memref<16x128xf32, #tpu.memory_space<vmem>>, %arg2: memref<16x16xf32, #tpu.memory_space<vmem>>, %arg3: memref<16x1xf32, #tpu.memory_space<vmem>>, %arg4: memref<8x16xf32, #tpu.memory_space<vmem>>, %arg5: memref<8x1xf32, #tpu.memory_space<vmem>>, %arg6: memref<8x8xf32, #tpu.memory_space<vmem>>, %arg7: memref<8x1xf32, #tpu.memory_space<vmem>>, %arg8: memref<1x8xf32, #tpu.memory_space<vmem>>, %arg9: memref<1x1xf32, #tpu.memory_space<vmem>>, %arg10: memref<1x128xf32, #tpu.memory_space<vmem>>) attributes {dimension_semantics = [#tpu.dimension_semantics<parallel>], iteration_bounds = array<i64: 1>, scalar_prefetch = 0 : i64, scratch_operands = 0 : i64, tpu.core_type = #tpu.core_type<tc>, window_params = [{transform_indices = @transform_0, window_bounds = array<i64: 16, 128>}, {pipeline_mode = #tpu.pipeline_mode<synchronous>, transform_indices = @transform_1, window_bounds = array<i64: 16, 16>}, {pipeline_mode = #tpu.pipeline_mode<synchronous>, transform_indices = @transform_2, window_bounds = array<i64: 16, 1>}, {pipeline_mode = #tpu.pipeline_mode<synchronous>, transform_indices = @transform_3, window_bounds = array<i64: 8, 16>}, {pipeline_mode = #tpu.pipeline_mode<synchronous>, transform_indices = @transform_4, window_bounds = array<i64: 8, 1>}, {pipeline_mode = #tpu.pipeline_mode<synchronous>, transform_indices = @transform_5, window_bounds = array<i64: 8, 8>}, {pipeline_mode = #tpu.pipeline_mode<synchronous>, transform_indices = @transform_6, window_bounds = array<i64: 8, 1>}, {pipeline_mode = #tpu.pipeline_mode<synchronous>, transform_indices = @transform_7, window_bounds = array<i64: 1, 8>}, {pipeline_mode = #tpu.pipeline_mode<synchronous>, transform_indices = @transform_8, window_bounds = array<i64: 1, 1>}, {transform_indices = @transform_9, window_bounds = array<i64: 1, 128>}]} {
    %c0 = arith.constant 0 : index
    %c0_0 = arith.constant 0 : index
    %0 = vector.load %arg1[%c0, %c0_0] : memref<16x128xf32, #tpu.memory_space<vmem>>, vector<16x128xf32>
    %c0_1 = arith.constant 0 : index
    %c0_2 = arith.constant 0 : index
    %1 = vector.load %arg2[%c0_1, %c0_2] : memref<16x16xf32, #tpu.memory_space<vmem>>, vector<16x16xf32>
    %cst = arith.constant dense<0.000000e+00> : vector<16x128xf32>
    %2 = tpu.matmul %1, %0, %cst {dimension_numbers = #tpu.dot_dimension_numbers<[1], [0], [0], [1], [0, 0, 1, 1], [], []>} : vector<16x16xf32>, vector<16x128xf32>, vector<16x128xf32> -> vector<16x128xf32>
    %c0_3 = arith.constant 0 : index
    %c0_4 = arith.constant 0 : index
    %3 = vector.load %arg3[%c0_3, %c0_4] : memref<16x1xf32, #tpu.memory_space<vmem>>, vector<16x1xf32>
    %4 = vector.broadcast %3 : vector<16x1xf32> to vector<16x128xf32>
    %5 = arith.addf %2, %4 : vector<16x128xf32>
    %cst_5 = arith.constant 0.000000e+00 : f32
    %6 = vector.broadcast %cst_5 : f32 to vector<16x128xf32>
    %7 = arith.cmpf ogt, %5, %6 : vector<16x128xf32>
    %cst_6 = arith.constant 0.00999999977 : f32
    %8 = vector.broadcast %cst_6 : f32 to vector<16x128xf32>
    %9 = arith.mulf %8, %5 : vector<16x128xf32>
    %10 = arith.select %7, %5, %9 : vector<16x128xi1>, vector<16x128xf32>
    %c0_7 = arith.constant 0 : index
    %c0_8 = arith.constant 0 : index
    %11 = vector.load %arg4[%c0_7, %c0_8] : memref<8x16xf32, #tpu.memory_space<vmem>>, vector<8x16xf32>
    %cst_9 = arith.constant dense<0.000000e+00> : vector<8x128xf32>
    %12 = tpu.matmul %11, %10, %cst_9 {dimension_numbers = #tpu.dot_dimension_numbers<[1], [0], [0], [1], [0, 0, 1, 1], [], []>} : vector<8x16xf32>, vector<16x128xf32>, vector<8x128xf32> -> vector<8x128xf32>
    %c0_10 = arith.constant 0 : index
    %c0_11 = arith.constant 0 : index
    %13 = vector.load %arg5[%c0_10, %c0_11] : memref<8x1xf32, #tpu.memory_space<vmem>>, vector<8x1xf32>
    %14 = vector.broadcast %13 : vector<8x1xf32> to vector<8x128xf32>
    %15 = arith.addf %12, %14 : vector<8x128xf32>
    %cst_12 = arith.constant 0.000000e+00 : f32
    %16 = vector.broadcast %cst_12 : f32 to vector<8x128xf32>
    %17 = arith.cmpf ogt, %15, %16 : vector<8x128xf32>
    %cst_13 = arith.constant 0.00999999977 : f32
    %18 = vector.broadcast %cst_13 : f32 to vector<8x128xf32>
    %19 = arith.mulf %18, %15 : vector<8x128xf32>
    %20 = arith.select %17, %15, %19 : vector<8x128xi1>, vector<8x128xf32>
    %c0_14 = arith.constant 0 : index
    %c0_15 = arith.constant 0 : index
    %21 = vector.load %arg6[%c0_14, %c0_15] : memref<8x8xf32, #tpu.memory_space<vmem>>, vector<8x8xf32>
    %cst_16 = arith.constant dense<0.000000e+00> : vector<8x128xf32>
    %22 = tpu.matmul %21, %20, %cst_16 {dimension_numbers = #tpu.dot_dimension_numbers<[1], [0], [0], [1], [0, 0, 1, 1], [], []>} : vector<8x8xf32>, vector<8x128xf32>, vector<8x128xf32> -> vector<8x128xf32>
    %c0_17 = arith.constant 0 : index
    %c0_18 = arith.constant 0 : index
    %23 = vector.load %arg7[%c0_17, %c0_18] : memref<8x1xf32, #tpu.memory_space<vmem>>, vector<8x1xf32>
    %24 = vector.broadcast %23 : vector<8x1xf32> to vector<8x128xf32>
    %25 = arith.addf %22, %24 : vector<8x128xf32>
    %cst_19 = arith.constant 0.000000e+00 : f32
    %26 = vector.broadcast %cst_19 : f32 to vector<8x128xf32>
    %27 = arith.cmpf ogt, %25, %26 : vector<8x128xf32>
    %cst_20 = arith.constant 0.00999999977 : f32
    %28 = vector.broadcast %cst_20 : f32 to vector<8x128xf32>
    %29 = arith.mulf %28, %25 : vector<8x128xf32>
    %30 = arith.select %27, %25, %29 : vector<8x128xi1>, vector<8x128xf32>
    %c0_21 = arith.constant 0 : index
    %c0_22 = arith.constant 0 : index
    %31 = vector.load %arg8[%c0_21, %c0_22] : memref<1x8xf32, #tpu.memory_space<vmem>>, vector<1x8xf32>
    %cst_23 = arith.constant dense<0.000000e+00> : vector<1x128xf32>
    %32 = tpu.matmul %31, %30, %cst_23 {dimension_numbers = #tpu.dot_dimension_numbers<[1], [0], [0], [1], [0, 0, 1, 1], [], []>} : vector<1x8xf32>, vector<8x128xf32>, vector<1x128xf32> -> vector<1x128xf32>
    %c0_24 = arith.constant 0 : index
    %c0_25 = arith.constant 0 : index
    %33 = vector.load %arg9[%c0_24, %c0_25] : memref<1x1xf32, #tpu.memory_space<vmem>>, vector<1x1xf32>
    %34 = vector.broadcast %33 : vector<1x1xf32> to vector<1x128xf32>
    %35 = arith.addf %32, %34 : vector<1x128xf32>
    %36 = arith.negf %35 : vector<1x128xf32>
    %37 = math.exp %36 : vector<1x128xf32>
    %cst_26 = arith.constant 1.000000e+00 : f32
    %38 = vector.broadcast %cst_26 : f32 to vector<1x128xf32>
    %39 = arith.addf %38, %37 : vector<1x128xf32>
    %40 = arith.divf %38, %39 : vector<1x128xf32>
    %c0_27 = arith.constant 0 : index
    %c0_28 = arith.constant 0 : index
    %41 = vector.load %arg10[%c0_27, %c0_28] : memref<1x128xf32, #tpu.memory_space<vmem>>, vector<1x128xf32>
    tpu.vector_store %arg10[%c0_27, %c0_28], %40 {strides = array<i32>} : memref<1x128xf32, #tpu.memory_space<vmem>>, vector<1x128xf32>,
    return
  }
  func.func @transform_0(%arg0: i32) -> (i32, i32) {
    %c0_i32 = arith.constant 0 : i32
    %c0_i32_0 = arith.constant 0 : i32
    return %c0_i32, %arg0 : i32, i32
  }
  func.func @transform_1(%arg0: i32) -> (i32, i32) {
    %c0_i32 = arith.constant 0 : i32
    %c0_i32_0 = arith.constant 0 : i32
    %c0_i32_1 = arith.constant 0 : i32
    return %c0_i32, %c0_i32_0 : i32, i32
  }
  func.func @transform_2(%arg0: i32) -> (i32, i32) {
    %c0_i32 = arith.constant 0 : i32
    %c0_i32_0 = arith.constant 0 : i32
    %c0_i32_1 = arith.constant 0 : i32
    return %c0_i32, %c0_i32_0 : i32, i32
  }
  func.func @transform_3(%arg0: i32) -> (i32, i32) {
    %c0_i32 = arith.constant 0 : i32
    %c0_i32_0 = arith.constant 0 : i32
    %c0_i32_1 = arith.constant 0 : i32
    return %c0_i32, %c0_i32_0 : i32, i32
  }
  func.func @transform_4(%arg0: i32) -> (i32, i32) {
    %c0_i32 = arith.constant 0 : i32
    %c0_i32_0 = arith.constant 0 : i32
    %c0_i32_1 = arith.constant 0 : i32
    return %c0_i32, %c0_i32_0 : i32, i32
  }
  func.func @transform_5(%arg0: i32) -> (i32, i32) {
    %c0_i32 = arith.constant 0 : i32
    %c0_i32_0 = arith.constant 0 : i32
    %c0_i32_1 = arith.constant 0 : i32
    return %c0_i32, %c0_i32_0 : i32, i32
  }
  func.func @transform_6(%arg0: i32) -> (i32, i32) {
    %c0_i32 = arith.constant 0 : i32
    %c0_i32_0 = arith.constant 0 : i32
    %c0_i32_1 = arith.constant 0 : i32
    return %c0_i32, %c0_i32_0 : i32, i32
  }
  func.func @transform_7(%arg0: i32) -> (i32, i32) {
    %c0_i32 = arith.constant 0 : i32
    %c0_i32_0 = arith.constant 0 : i32
    %c0_i32_1 = arith.constant 0 : i32
    return %c0_i32, %c0_i32_0 : i32, i32
  }
  func.func @transform_8(%arg0: i32) -> (i32, i32) {
    %c0_i32 = arith.constant 0 : i32
    %c0_i32_0 = arith.constant 0 : i32
    %c0_i32_1 = arith.constant 0 : i32
    return %c0_i32, %c0_i32_0 : i32, i32
  }
  func.func @transform_9(%arg0: i32) -> (i32, i32) {
    %c0_i32 = arith.constant 0 : i32
    %c0_i32_0 = arith.constant 0 : i32
    return %c0_i32, %arg0 : i32, i32
  }
}

</mosaic_0001>

<llo_original>
// kernel: tpu_custom_call.1
$region0: #{tpu_custom_call.1}
  #allocation0 [shape = 'u32[]', space=smem, size = 0x4, offset = 0x4, fixed_abs, tag = 'smem constant byte address 0x4 - core index']
  #allocation1 [shape = 'u32[144,128]{1,0:T(1,128)}', space=vmem, size = 0x12000, scoped, tag = 'internal scratch']
  #allocation2 [shape = 'f32[1,1]{1,0:T(1,128)S(1)}', space=vmem, size = 0x200, scoped, tag = 'scoped memory for tpu_custom_call.1']
  %s0 = inlined_call_operand.vmem [shape: f32[16,128], index: 0, kind: input, shape index: {}]
  %s1 = inlined_call_operand.vmem [shape: f32[16,16], index: 1, kind: input, shape index: {}]
  %s2 = inlined_call_operand.vmem [shape: f32[16,1], index: 2, kind: input, shape index: {}]
  %s3 = inlined_call_operand.vmem [shape: f32[8,16], index: 3, kind: input, shape index: {}]
  %s4 = inlined_call_operand.vmem [shape: f32[8,1], index: 4, kind: input, shape index: {}]
  %s5 = inlined_call_operand.vmem [shape: f32[8,8], index: 5, kind: input, shape index: {}]
  %s6 = inlined_call_operand.vmem [shape: f32[8,1], index: 6, kind: input, shape index: {}]
  %s7 = inlined_call_operand.vmem [shape: f32[1,8], index: 7, kind: input, shape index: {}]
  %s8 = inlined_call_operand.<no memory space> [shape: f32[1,1], index: 8, kind: input, shape index: {}]
  %s9 = inlined_call_operand.hbm [shape: f32[1,128], index: 9, kind: output, shape index: {}]
  %s10 = sld [smem:[#allocation0]]
  $region46: #{tpu_custom_call.1} parent=0
    _
  %s12 = ssub.s32 1, %s10
  %s13 = scalar_select 0, %s12, %s10
  %v14 = vstv %s8
  %15 = vst [vmem:[#allocation2] sm:$0x1] %v14
  $region1: #{tpu_custom_call.1} parent=0
    #allocation3 [shape = 'u8[512]{0}', space=vmem, size = 0x400, scoped, tag = 'output window, operand 0, single buffered']
    #allocation4 [shape = 's32[1]{0}', space=sflag, size = 0x4, scoped, tag = 'scoped memory for tpu_custom_call.1']
    %16 = vsyncpa [#allocation4], 0
    // Predicated region
    $region2: #{tpu_custom_call.1} parent=1 // pred_check
      _
    $region3: #{tpu_custom_call.1} parent=1 // pred_check_branch
      %18 = sbr.rel (0) target = $region5
    $region4: #{tpu_custom_call.1} parent=1 // pred_region
      _
    $region5: #{tpu_custom_call.1} parent=1 // pred_fallthru
      _
    // Predicated region
    $region6: #{tpu_custom_call.1} parent=1 // pred_check
      _
    $region7: #{tpu_custom_call.1} parent=1 // pred_check_branch
      %20 = sbr.rel (0) target = $region9
    $region8: #{tpu_custom_call.1} parent=1 // pred_region
      _
    $region9: #{tpu_custom_call.1} parent=1 // pred_fallthru
      _
    // Predicated region
    $region10: #{tpu_custom_call.1} parent=1 // pred_check
      _
    $region11: #{tpu_custom_call.1} parent=1 // pred_check_branch
      %22 = sbr.rel (0) target = $region13
    $region12: #{tpu_custom_call.1} parent=1 // pred_region
      _
    $region13: #{tpu_custom_call.1} parent=1 // pred_fallthru
      _
    // Predicated region
    $region14: #{tpu_custom_call.1} parent=1 // pred_check
      _
    $region15: #{tpu_custom_call.1} parent=1 // pred_check_branch
      %24 = sbr.rel (0) target = $region17
    $region16: #{tpu_custom_call.1} parent=1 // pred_region
      _
    $region17: #{tpu_custom_call.1} parent=1 // pred_fallthru
      _
    // Predicated region
    $region18: #{tpu_custom_call.1} parent=1 // pred_check
      _
    $region19: #{tpu_custom_call.1} parent=1 // pred_check_branch
      %26 = sbr.rel (0) target = $region21
    $region20: #{tpu_custom_call.1} parent=1 // pred_region
      _
    $region21: #{tpu_custom_call.1} parent=1 // pred_fallthru
      _
    // Predicated region
    $region22: #{tpu_custom_call.1} parent=1 // pred_check
      _
    $region23: #{tpu_custom_call.1} parent=1 // pred_check_branch
      %28 = sbr.rel (0) target = $region25
    $region24: #{tpu_custom_call.1} parent=1 // pred_region
      _
    $region25: #{tpu_custom_call.1} parent=1 // pred_fallthru
      _
    // Predicated region
    $region26: #{tpu_custom_call.1} parent=1 // pred_check
      _
    $region27: #{tpu_custom_call.1} parent=1 // pred_check_branch
      %30 = sbr.rel (0) target = $region29
    $region28: #{tpu_custom_call.1} parent=1 // pred_region
      _
    $region29: #{tpu_custom_call.1} parent=1 // pred_fallthru
      _
    // Predicated region
    $region30: #{tpu_custom_call.1} parent=1 // pred_check
      _
    $region31: #{tpu_custom_call.1} parent=1 // pred_check_branch
      %32 = sbr.rel (0) target = $region33
    $region32: #{tpu_custom_call.1} parent=1 // pred_region
      _
    $region33: #{tpu_custom_call.1} parent=1 // pred_fallthru
      _
    // Predicated region
    $region34: #{tpu_custom_call.1} parent=1 // pred_check
      _
    $region35: #{tpu_custom_call.1} parent=1 // pred_check_branch
      %34 = sbr.rel (0) target = $region37
    $region36: #{tpu_custom_call.1} parent=1 // pred_region
      _
    $region37: #{tpu_custom_call.1} parent=1 // pred_fallthru
      _
    %v35 = vld [vmem:[%s0] sm:$0xff]
    %v36 = vld [vmem:[%s0 + $0x8] sm:$0xff]
    %v37 = vld [vmem:[%s1] sm:$0xff]
    %v38 = vld [vmem:[%s1 + $0x8] sm:$0xff]
    %v39 = vld [vmem:[%s2] sm:$0xff]
    %v40 = vld [vmem:[%s2 + $0x8] sm:$0xff]
    %42 = vset.pattern.permute.xlu0 0
    %43 = vperm.xlu0 %42, %v39
    %v44 = vpop.permute.xlu0 %43
    %47 = vset.pattern.permute.xlu0 0
    %48 = vperm.xlu0 %47, %v40
    %v49 = vpop.permute.xlu0 %48
    %vm51 = vcmask 130048
    %v53 = vsel %vm51, %v37, 0
    %v56 = vsel %vm51, %v38, 0
    %58 = vmatprep.subr.mxu0 0.0
    %59 = vmatpush1.msra.mxu0 %v35
    %60 = vmatprep.subr.mxu0 0.0
    %61 = vmatpush1.msra.mxu0 %v36
    %62 = vmatprep.subr.mxu0 0.0
    %63 = vmatpush1.msra.mxu0 0.0
    %64 = vmatprep.subr.mxu0 0.0
    %65 = vmatpush1.msra.mxu0 0.0
    %66 = vmatprep.subr.mxu0 0.0
    %67 = vmatpush1.msra.mxu0 0.0
    %68 = vmatprep.subr.mxu0 0.0
    %69 = vmatpush1.msra.mxu0 0.0
    %70 = vmatprep.subr.mxu0 0.0
    %71 = vmatpush1.msra.mxu0 0.0
    %72 = vmatprep.subr.mxu0 0.0
    %73 = vmatpush1.msra.mxu0 0.0
    %74 = vmatprep.subr.mxu0 0.0
    %75 = vmatpush1.msra.mxu0 0.0
    %76 = vmatprep.subr.mxu0 0.0
    %77 = vmatpush1.msra.mxu0 0.0
    %78 = vmatprep.subr.mxu0 0.0
    %79 = vmatpush1.msra.mxu0 0.0
    %80 = vmatprep.subr.mxu0 0.0
    %81 = vmatpush1.msra.mxu0 0.0
    %82 = vmatprep.subr.mxu0 0.0
    %83 = vmatpush1.msra.mxu0 0.0
    %84 = vmatprep.subr.mxu0 0.0
    %85 = vmatpush1.msra.mxu0 0.0
    %86 = vmatprep.subr.mxu0 0.0
    %87 = vmatpush1.msra.mxu0 0.0
    %88 = vmatprep.subr.mxu0 0.0
    %89 = vmatpush1.msra.mxu0 0.0
    %90 = vmatprep.subr.mxu0 0.0
    %91 = vmatpush1.msra.mxu0 0.0
    %92 = vmatprep.subr.mxu0 0.0
    %93 = vmatpush1.msra.mxu0 0.0
    %94 = vmatprep.subr.mxu0 0.0
    %95 = vmatpush1.msra.mxu0 0.0
    %96 = vmatprep.subr.mxu0 0.0
    %97 = vmatpush1.msra.mxu0 0.0
    %98 = vmatprep.subr.mxu0 0.0
    %99 = vmatpush1.msra.mxu0 0.0
    %100 = vmatprep.subr.mxu0 0.0
    %101 = vmatpush1.msra.mxu0 0.0
    %102 = vmatprep.subr.mxu0 0.0
    %103 = vmatpush1.msra.mxu0 0.0
    %104 = vmatprep.subr.mxu0 0.0
    %105 = vmatpush1.msra.mxu0 0.0
    %106 = vmatprep.subr.mxu0 0.0
    %107 = vmatpush1.msra.mxu0 0.0
    %108 = vmatprep.subr.mxu0 0.0
    %109 = vmatpush1.msra.mxu0 0.0
    %110 = vmatprep.subr.mxu0 0.0
    %111 = vmatpush1.msra.mxu0 0.0
    %112 = vmatprep.subr.mxu0 0.0
    %113 = vmatpush1.msra.mxu0 0.0
    %114 = vmatprep.subr.mxu0 0.0
    %115 = vmatpush1.msra.mxu0 0.0
    %116 = vmatprep.subr.mxu0 0.0
    %117 = vmatpush1.msra.mxu0 0.0
    %118 = vmatprep.subr.mxu0 0.0
    %119 = vmatpush1.msra.mxu0 0.0
    %120 = vmatprep.subr.mxu0 0.0
    %121 = vmatpush1.msra.mxu0 0.0
    %122 = vmatprep.mubr.f32.mxu0 0.0
    %123 = vmatmul.mubr.f32.gmra.mrb[0].mxu0 %v53
    %v124 = vpop.f32.mrb[0].mxu0
    %v125 = vadd.f32 %v44, %v124
    %v126 = vpop.f32.mrb[0].mxu0
    %127 = vmatprep.mubr.f32.mxu0 0.0
    %128 = vmatmul.mubr.f32.gmra.mrb[0].mxu0 %v56
    %v129 = vpop.f32.mrb[0].mxu0
    %v130 = vadd.f32 %v49, %v129
    %v131 = vpop.f32.mrb[0].mxu0
    %132 = vdwg.mxu0
    %vm133 = vcmp.gt.f32.partialorder %v125, 0.0
    %vm134 = vcmp.gt.f32.partialorder %v130, 0.0
    %v135 = vmul.f32 %v125, 0.01
    %v136 = vmul.f32 %v130, 0.01
    %v137 = vsel %vm133, %v125, %v135
    %v138 = vsel %vm134, %v130, %v136
    %v139 = vld [vmem:[%s3] sm:$0xff]
    %v140 = vld [vmem:[%s4] sm:$0xff]
    %142 = vset.pattern.permute.xlu0 0
    %143 = vperm.xlu0 %142, %v140
    %v144 = vpop.permute.xlu0 %143
    %v147 = vsel %vm51, %v139, 0
    %149 = vmatprep.subr.mxu0 0.0
    %150 = vmatpush1.msra.mxu0 %v137
    %151 = vmatprep.subr.mxu0 0.0
    %152 = vmatpush1.msra.mxu0 %v138
    %153 = vmatprep.subr.mxu0 0.0
    %154 = vmatpush1.msra.mxu0 0.0
    %155 = vmatprep.subr.mxu0 0.0
    %156 = vmatpush1.msra.mxu0 0.0
    %157 = vmatprep.subr.mxu0 0.0
    %158 = vmatpush1.msra.mxu0 0.0
    %159 = vmatprep.subr.mxu0 0.0
    %160 = vmatpush1.msra.mxu0 0.0
    %161 = vmatprep.subr.mxu0 0.0
    %162 = vmatpush1.msra.mxu0 0.0
    %163 = vmatprep.subr.mxu0 0.0
    %164 = vmatpush1.msra.mxu0 0.0
    %165 = vmatprep.subr.mxu0 0.0
    %166 = vmatpush1.msra.mxu0 0.0
    %167 = vmatprep.subr.mxu0 0.0
    %168 = vmatpush1.msra.mxu0 0.0
    %169 = vmatprep.subr.mxu0 0.0
    %170 = vmatpush1.msra.mxu0 0.0
    %171 = vmatprep.subr.mxu0 0.0
    %172 = vmatpush1.msra.mxu0 0.0
    %173 = vmatprep.subr.mxu0 0.0
    %174 = vmatpush1.msra.mxu0 0.0
    %175 = vmatprep.subr.mxu0 0.0
    %176 = vmatpush1.msra.mxu0 0.0
    %177 = vmatprep.subr.mxu0 0.0
    %178 = vmatpush1.msra.mxu0 0.0
    %179 = vmatprep.subr.mxu0 0.0
    %180 = vmatpush1.msra.mxu0 0.0
    %181 = vmatprep.subr.mxu0 0.0
    %182 = vmatpush1.msra.mxu0 0.0
    %183 = vmatprep.subr.mxu0 0.0
    %184 = vmatpush1.msra.mxu0 0.0
    %185 = vmatprep.subr.mxu0 0.0
    %186 = vmatpush1.msra.mxu0 0.0
    %187 = vmatprep.subr.mxu0 0.0
    %188 = vmatpush1.msra.mxu0 0.0
    %189 = vmatprep.subr.mxu0 0.0
    %190 = vmatpush1.msra.mxu0 0.0
    %191 = vmatprep.subr.mxu0 0.0
    %192 = vmatpush1.msra.mxu0 0.0
    %193 = vmatprep.subr.mxu0 0.0
    %194 = vmatpush1.msra.mxu0 0.0
    %195 = vmatprep.subr.mxu0 0.0
    %196 = vmatpush1.msra.mxu0 0.0
    %197 = vmatprep.subr.mxu0 0.0
    %198 = vmatpush1.msra.mxu0 0.0
    %199 = vmatprep.subr.mxu0 0.0
    %200 = vmatpush1.msra.mxu0 0.0
    %201 = vmatprep.subr.mxu0 0.0
    %202 = vmatpush1.msra.mxu0 0.0
    %203 = vmatprep.subr.mxu0 0.0
    %204 = vmatpush1.msra.mxu0 0.0
    %205 = vmatprep.subr.mxu0 0.0
    %206 = vmatpush1.msra.mxu0 0.0
    %207 = vmatprep.subr.mxu0 0.0
    %208 = vmatpush1.msra.mxu0 0.0
    %209 = vmatprep.subr.mxu0 0.0
    %210 = vmatpush1.msra.mxu0 0.0
    %211 = vmatprep.subr.mxu0 0.0
    %212 = vmatpush1.msra.mxu0 0.0
    %213 = vmatprep.mubr.f32.mxu0 0.0
    %214 = vmatmul.mubr.f32.gmra.mrb[0].mxu0 %v147
    %v215 = vpop.f32.mrb[0].mxu0
    %v216 = vadd.f32 %v144, %v215
    %v217 = vpop.f32.mrb[0].mxu0
    %218 = vdwg.mxu0
    %vm219 = vcmp.gt.f32.partialorder %v216, 0.0
    %v220 = vmul.f32 %v216, 0.01
    %v221 = vsel %vm219, %v216, %v220
    %v222 = vld [vmem:[%s5] sm:$0xff]
    %v223 = vld [vmem:[%s6] sm:$0xff]
    %225 = vset.pattern.permute.xlu0 0
    %226 = vperm.xlu0 %225, %v223
    %v227 = vpop.permute.xlu0 %226
    %vm229 = vcmask 64512
    %v231 = vsel %vm229, %v222, 0
    %233 = vmatprep.subr.mxu0 0.0
    %234 = vmatpush1.msra.mxu0 %v221
    %235 = vmatprep.subr.mxu0 0.0
    %236 = vmatpush1.msra.mxu0 0.0
    %237 = vmatprep.subr.mxu0 0.0
    %238 = vmatpush1.msra.mxu0 0.0
    %239 = vmatprep.subr.mxu0 0.0
    %240 = vmatpush1.msra.mxu0 0.0
    %241 = vmatprep.subr.mxu0 0.0
    %242 = vmatpush1.msra.mxu0 0.0
    %243 = vmatprep.subr.mxu0 0.0
    %244 = vmatpush1.msra.mxu0 0.0
    %245 = vmatprep.subr.mxu0 0.0
    %246 = vmatpush1.msra.mxu0 0.0
    %247 = vmatprep.subr.mxu0 0.0
    %248 = vmatpush1.msra.mxu0 0.0
    %249 = vmatprep.subr.mxu0 0.0
    %250 = vmatpush1.msra.mxu0 0.0
    %251 = vmatprep.subr.mxu0 0.0
    %252 = vmatpush1.msra.mxu0 0.0
    %253 = vmatprep.subr.mxu0 0.0
    %254 = vmatpush1.msra.mxu0 0.0
    %255 = vmatprep.subr.mxu0 0.0
    %256 = vmatpush1.msra.mxu0 0.0
    %257 = vmatprep.subr.mxu0 0.0
    %258 = vmatpush1.msra.mxu0 0.0
    %259 = vmatprep.subr.mxu0 0.0
    %260 = vmatpush1.msra.mxu0 0.0
    %261 = vmatprep.subr.mxu0 0.0
    %262 = vmatpush1.msra.mxu0 0.0
    %263 = vmatprep.subr.mxu0 0.0
    %264 = vmatpush1.msra.mxu0 0.0
    %265 = vmatprep.subr.mxu0 0.0
    %266 = vmatpush1.msra.mxu0 0.0
    %267 = vmatprep.subr.mxu0 0.0
    %268 = vmatpush1.msra.mxu0 0.0
    %269 = vmatprep.subr.mxu0 0.0
    %270 = vmatpush1.msra.mxu0 0.0
    %271 = vmatprep.subr.mxu0 0.0
    %272 = vmatpush1.msra.mxu0 0.0
    %273 = vmatprep.subr.mxu0 0.0
    %274 = vmatpush1.msra.mxu0 0.0
    %275 = vmatprep.subr.mxu0 0.0
    %276 = vmatpush1.msra.mxu0 0.0
    %277 = vmatprep.subr.mxu0 0.0
    %278 = vmatpush1.msra.mxu0 0.0
    %279 = vmatprep.subr.mxu0 0.0
    %280 = vmatpush1.msra.mxu0 0.0
    %281 = vmatprep.subr.mxu0 0.0
    %282 = vmatpush1.msra.mxu0 0.0
    %283 = vmatprep.subr.mxu0 0.0
    %284 = vmatpush1.msra.mxu0 0.0
    %285 = vmatprep.subr.mxu0 0.0
    %286 = vmatpush1.msra.mxu0 0.0
    %287 = vmatprep.subr.mxu0 0.0
    %288 = vmatpush1.msra.mxu0 0.0
    %289 = vmatprep.subr.mxu0 0.0
    %290 = vmatpush1.msra.mxu0 0.0
    %291 = vmatprep.subr.mxu0 0.0
    %292 = vmatpush1.msra.mxu0 0.0
    %293 = vmatprep.subr.mxu0 0.0
    %294 = vmatpush1.msra.mxu0 0.0
    %295 = vmatprep.subr.mxu0 0.0
    %296 = vmatpush1.msra.mxu0 0.0
    %297 = vmatprep.mubr.f32.mxu0 0.0
    %298 = vmatmul.mubr.f32.gmra.mrb[0].mxu0 %v231
    %v299 = vpop.f32.mrb[0].mxu0
    %v300 = vadd.f32 %v227, %v299
    %v301 = vpop.f32.mrb[0].mxu0
    %302 = vdwg.mxu0
    %vm303 = vcmp.gt.f32.partialorder %v300, 0.0
    %v304 = vmul.f32 %v300, 0.01
    %v305 = vsel %vm303, %v300, %v304
    %v306 = vld [vmem:[%s7] sm:$0x1]
    %v307 = vld [vmem:[#allocation2] sm:$0x1]
    %309 = vset.pattern.permute.xlu0 0
    %310 = vperm.xlu0 %309, %v307
    %v311 = vpop.permute.xlu0 %310
    %v313 = vlaneseq
    %v314 = vshrl.u32 %v313, 7
    %v315 = vsub.s32 0, %v314
    %v316 = vrot.slane %v311, %v315
    %v318 = vsel %vm229, %v306, 0
    %320 = vmatprep.subr.mxu0 0.0
    %321 = vmatpush1.msra.mxu0 %v305
    %322 = vmatprep.subr.mxu0 0.0
    %323 = vmatpush1.msra.mxu0 0.0
    %324 = vmatprep.subr.mxu0 0.0
    %325 = vmatpush1.msra.mxu0 0.0
    %326 = vmatprep.subr.mxu0 0.0
    %327 = vmatpush1.msra.mxu0 0.0
    %328 = vmatprep.subr.mxu0 0.0
    %329 = vmatpush1.msra.mxu0 0.0
    %330 = vmatprep.subr.mxu0 0.0
    %331 = vmatpush1.msra.mxu0 0.0
    %332 = vmatprep.subr.mxu0 0.0
    %333 = vmatpush1.msra.mxu0 0.0
    %334 = vmatprep.subr.mxu0 0.0
    %335 = vmatpush1.msra.mxu0 0.0
    %336 = vmatprep.subr.mxu0 0.0
    %337 = vmatpush1.msra.mxu0 0.0
    %338 = vmatprep.subr.mxu0 0.0
    %339 = vmatpush1.msra.mxu0 0.0
    %340 = vmatprep.subr.mxu0 0.0
    %341 = vmatpush1.msra.mxu0 0.0
    %342 = vmatprep.subr.mxu0 0.0
    %343 = vmatpush1.msra.mxu0 0.0
    %344 = vmatprep.subr.mxu0 0.0
    %345 = vmatpush1.msra.mxu0 0.0
    %346 = vmatprep.subr.mxu0 0.0
    %347 = vmatpush1.msra.mxu0 0.0
    %348 = vmatprep.subr.mxu0 0.0
    %349 = vmatpush1.msra.mxu0 0.0
    %350 = vmatprep.subr.mxu0 0.0
    %351 = vmatpush1.msra.mxu0 0.0
    %352 = vmatprep.subr.mxu0 0.0
    %353 = vmatpush1.msra.mxu0 0.0
    %354 = vmatprep.subr.mxu0 0.0
    %355 = vmatpush1.msra.mxu0 0.0
    %356 = vmatprep.subr.mxu0 0.0
    %357 = vmatpush1.msra.mxu0 0.0
    %358 = vmatprep.subr.mxu0 0.0
    %359 = vmatpush1.msra.mxu0 0.0
    %360 = vmatprep.subr.mxu0 0.0
    %361 = vmatpush1.msra.mxu0 0.0
    %362 = vmatprep.subr.mxu0 0.0
    %363 = vmatpush1.msra.mxu0 0.0
    %364 = vmatprep.subr.mxu0 0.0
    %365 = vmatpush1.msra.mxu0 0.0
    %366 = vmatprep.subr.mxu0 0.0
    %367 = vmatpush1.msra.mxu0 0.0
    %368 = vmatprep.subr.mxu0 0.0
    %369 = vmatpush1.msra.mxu0 0.0
    %370 = vmatprep.subr.mxu0 0.0
    %371 = vmatpush1.msra.mxu0 0.0
    %372 = vmatprep.subr.mxu0 0.0
    %373 = vmatpush1.msra.mxu0 0.0
    %374 = vmatprep.subr.mxu0 0.0
    %375 = vmatpush1.msra.mxu0 0.0
    %376 = vmatprep.subr.mxu0 0.0
    %377 = vmatpush1.msra.mxu0 0.0
    %378 = vmatprep.subr.mxu0 0.0
    %379 = vmatpush1.msra.mxu0 0.0
    %380 = vmatprep.subr.mxu0 0.0
    %381 = vmatpush1.msra.mxu0 0.0
    %382 = vmatprep.subr.mxu0 0.0
    %383 = vmatpush1.msra.mxu0 0.0
    %384 = vmatprep.mubr.f32.mxu0 0.0
    %385 = vmatmul.mubr.f32.gmra.mrb[0].mxu0 %v318
    %v386 = vpop.f32.mrb[0].mxu0
    %v387 = vadd.f32 %v316, %v386
    %v388 = vpop.f32.mrb[0].mxu0
    %389 = vdwg.mxu0
    %v390 = vxor.u32 %v387, 2147483648
    %v391 = vmul.f32 %v390, 1.442695
    %v392 = vpow.pop %v391
    %v393 = vadd.f32 %v392, 1.0
    %v394 = vrcp.pop %v393
    %v395 = vmul.f32 1.0, %v394
    %396 = vst [vmem:[#allocation3] sm:$0x1] %v395
    // Predicated region
    $region38: #{tpu_custom_call.1} parent=1 // pred_check
      _
    $region39: #{tpu_custom_call.1} parent=1 // pred_check_branch
      %398 = sbr.rel (0) target = $region41
    $region40: #{tpu_custom_call.1} parent=1 // pred_region
      %s400 = ssub.s32 16, 16
      %401 = vsyncadd [#allocation4], %s400
      %s403 = sshll.u32 [#allocation3], 4
      %s404 = int_to_ptr.vmem [resolvable:$true] %s403
      %406 = dma.vmem_to_hbm [thread:$0]  %s404, 16, %s9, [#allocation4]
    $region41: #{tpu_custom_call.1} parent=1 // pred_fallthru
      _
    // Predicated region
    $region42: #{tpu_custom_call.1} parent=1 // pred_check
      _
    $region43: #{tpu_custom_call.1} parent=1 // pred_check_branch
      %408 = sbr.rel (0) target = $region45
    $region44: #{tpu_custom_call.1} parent=1 // pred_region
      %409 = dma.done [#allocation4], 16
    $region45: #{tpu_custom_call.1} parent=1 // pred_fallthru
      _
    %410 = vsyncpa [#allocation4], 1

</llo_original>
